<compile_context>
chip_gen: v7x
topology: tpu7x:2x2x1
jax: 0.10.0
libtpu: 0.0.40
codegen_flags: <defaults>
</compile_context>

<pallas_src>
import functools

import jax
import jax.numpy as jnp
from jax.experimental import pallas as pl
from jax.experimental.pallas import tpu as pltpu

_H = 100    # true hidden width of the PyTorch model
_HP = 128   # hidden width padded to the 128-lane vreg width


def _round_up(n, m):
    return ((n + m - 1) // m) * m


def _mlp_kernel(xT_ref, w1_ref, b1_ref, w2_ref, b2_ref, w3_ref, b3_ref,
                w4_ref, b4_ref, w5_ref, b5_ref, oT_ref):
    xT = xT_ref[...]                                                  # (1, tm) f32, batch on lanes
    # Layer 1 (in_features=1): outer product via broadcasting on the VPU.
    h = jnp.maximum(w1_ref[...] * xT + b1_ref[...], 0.0)             # (128,1)*(1,tm)+(128,1) -> (128, tm)
    # Layers 2-4: padded 128x128 MXU matmuls, bf16 operands, f32 accumulation.
    for w_ref, b_ref in ((w2_ref, b2_ref), (w3_ref, b3_ref), (w4_ref, b4_ref)):
        h = jnp.dot(w_ref[...], h.astype(jnp.bfloat16),
                    preferred_element_type=jnp.float32)               # (128, tm) f32
        h = jnp.maximum(h + b_ref[...], 0.0)
    # Layer 5 (out_features=1): (1,128) @ (128,tm) -> lane-dense (1, tm).
    out = jnp.dot(w5_ref[...], h.astype(jnp.bfloat16),
                  preferred_element_type=jnp.float32)
    oT_ref[...] = (out + b5_ref[...]).astype(oT_ref.dtype)


def _prepare_params(p):
    """Pad hidden dim 100->128 (zeros propagate cleanly through bias+ReLU) and
    cast the big matmul weights to bf16. PyTorch layout: w[k] is (out, in)."""
    f32, bf16 = jnp.float32, jnp.bfloat16
    w1 = jnp.zeros((_HP, 1), f32).at[:_H, :].set(p["w1"])             # (128, 1)
    b1 = jnp.zeros((_HP, 1), f32).at[:_H, 0].set(p["b1"])             # (128, 1)
    flat = [w1, b1]
    for k in (2, 3, 4):
        w = jnp.zeros((_HP, _HP), f32).at[:_H, :_H].set(p[f"w{k}"]).astype(bf16)
        b = jnp.zeros((_HP, 1), f32).at[:_H, 0].set(p[f"b{k}"])
        flat += [w, b]
    w5 = jnp.zeros((1, _HP), f32).at[:, :_H].set(p["w5"]).astype(bf16)  # (1, 128)
    b5 = p["b5"].reshape(1, 1).astype(f32)                              # (1, 1)
    flat += [w5, b5]
    return flat


@functools.partial(jax.jit, static_argnames=("tm",))
def fcnn_forward(x, params, *, tm=512):
    """x: (N, 1) float32. params: dict w1..w5 (out,in) and b1..b5 (out,), torch layout."""
    N, F_in = x.shape
    assert F_in == 1
    tm = max(128, (int(tm) // 128) * 128)          # lane-aligned row tile
    tm_eff = min(tm, _round_up(N, 128))            # collapse to one step when N is small
    N_pad = _round_up(N, tm_eff)

    x_t = jnp.pad(x.astype(jnp.float32).T, ((0, 0), (0, N_pad - N)))   # (1, N_pad)
    flat = _prepare_params(params)

    grid_spec = pltpu.PrefetchScalarGridSpec(
        num_scalar_prefetch=0,
        grid=(N_pad // tm_eff,),
        in_specs=[pl.BlockSpec((1, tm_eff), lambda i: (0, i))] +
                 [pl.BlockSpec(a.shape, lambda i: (0, 0)) for a in flat],
        out_specs=pl.BlockSpec((1, tm_eff), lambda i: (0, i)),
    )
    out_t = pl.pallas_call(
        _mlp_kernel,
        out_shape=jax.ShapeDtypeStruct((1, N_pad), jnp.float32),
        grid_spec=grid_spec,
        compiler_params=pltpu.CompilerParams(
            dimension_semantics=("parallel",),      # megacore-shardable on v7x when grid > 1
            vmem_limit_bytes=48 * 1024 * 1024,      # headroom for large tm; fits v7x's 64 MiB
        ),
    )(x_t, *flat)
    return out_t[:, :N].T.astype(x.dtype)           # back to (N, 1)


def init_params(key):
    """Deterministic synthetic init mimicking nn.Linear: w (out,in), b (out,),
    U(-1/sqrt(in), 1/sqrt(in))."""
    dims = [(100, 1), (100, 100), (100, 100), (100, 100), (1, 100)]  # (out, in) per layer
    params = {}
    for idx, (fout, fin) in enumerate(dims, start=1):
        key, kw, kb = jax.random.split(key, 3)
        bound = 1.0 / (fin ** 0.5)
        params[f"w{idx}"] = jax.random.uniform(kw, (fout, fin), jnp.float32, -bound, bound)
        params[f"b{idx}"] = jax.random.uniform(kb, (fout,), jnp.float32, -bound, bound)
    return params


def _reference(x, p):
    h = x
    for k in (1, 2, 3, 4):
        h = jnp.maximum(h @ p[f"w{k}"].T + p[f"b{k}"], 0.0)
    return h @ p["w5"].T + p["b5"]


if __name__ == "__main__":
    key = jax.random.PRNGKey(0)
    key, kx = jax.random.split(key)
    N = 16                                        # small batch; padded to one 128-wide tile
    x = jax.random.normal(kx, (N, 1), jnp.float32)
    params = init_params(key)

    out = fcnn_forward(x, params)
    jax.block_until_ready(out)

    ref = _reference(x, params)
    assert out.shape == (N, 1)
    # bf16 MXU operands -> loosened tolerance vs the f32 reference.
    assert jnp.allclose(out, ref, atol=2e-2, rtol=2e-2), float(jnp.max(jnp.abs(out - ref)))
    print("KERNEL_OK")
</pallas_src>

<mosaic_0001>
module attributes {stable_mosaic.version = 11 : i64} {
  func.func @_mlp_kernel(%arg0: i32, %arg1: memref<1x128xf32, #tpu.memory_space<vmem>>, %arg2: memref<128x1xf32, #tpu.memory_space<vmem>>, %arg3: memref<128x1xf32, #tpu.memory_space<vmem>>, %arg4: memref<128x128xbf16, #tpu.memory_space<vmem>>, %arg5: memref<128x1xf32, #tpu.memory_space<vmem>>, %arg6: memref<128x128xbf16, #tpu.memory_space<vmem>>, %arg7: memref<128x1xf32, #tpu.memory_space<vmem>>, %arg8: memref<128x128xbf16, #tpu.memory_space<vmem>>, %arg9: memref<128x1xf32, #tpu.memory_space<vmem>>, %arg10: memref<1x128xbf16, #tpu.memory_space<vmem>>, %arg11: memref<1x1xf32, #tpu.memory_space<vmem>>, %arg12: memref<1x128xf32, #tpu.memory_space<vmem>>) attributes {dimension_semantics = [#tpu.dimension_semantics<parallel>], iteration_bounds = array<i64: 1>, scalar_prefetch = 0 : i64, scratch_operands = 0 : i64, tpu.core_type = #tpu.core_type<tc>, window_params = [{transform_indices = @transform_0, window_bounds = array<i64: 1, 128>}, {pipeline_mode = #tpu.pipeline_mode<synchronous>, transform_indices = @transform_1, window_bounds = array<i64: 128, 1>}, {pipeline_mode = #tpu.pipeline_mode<synchronous>, transform_indices = @transform_2, window_bounds = array<i64: 128, 1>}, {pipeline_mode = #tpu.pipeline_mode<synchronous>, transform_indices = @transform_3, window_bounds = array<i64: 128, 128>}, {pipeline_mode = #tpu.pipeline_mode<synchronous>, transform_indices = @transform_4, window_bounds = array<i64: 128, 1>}, {pipeline_mode = #tpu.pipeline_mode<synchronous>, transform_indices = @transform_5, window_bounds = array<i64: 128, 128>}, {pipeline_mode = #tpu.pipeline_mode<synchronous>, transform_indices = @transform_6, window_bounds = array<i64: 128, 1>}, {pipeline_mode = #tpu.pipeline_mode<synchronous>, transform_indices = @transform_7, window_bounds = array<i64: 128, 128>}, {pipeline_mode = #tpu.pipeline_mode<synchronous>, transform_indices = @transform_8, window_bounds = array<i64: 128, 1>}, {pipeline_mode = #tpu.pipeline_mode<synchronous>, transform_indices = @transform_9, window_bounds = array<i64: 1, 128>}, {pipeline_mode = #tpu.pipeline_mode<synchronous>, transform_indices = @transform_10, window_bounds = array<i64: 1, 1>}, {transform_indices = @transform_11, window_bounds = array<i64: 1, 128>}]} {
    %c0 = arith.constant 0 : index
    %c0_0 = arith.constant 0 : index
    %0 = vector.load %arg1[%c0, %c0_0] : memref<1x128xf32, #tpu.memory_space<vmem>>, vector<1x128xf32>
    %c0_1 = arith.constant 0 : index
    %c0_2 = arith.constant 0 : index
    %1 = vector.load %arg2[%c0_1, %c0_2] : memref<128x1xf32, #tpu.memory_space<vmem>>, vector<128x1xf32>
    %2 = vector.broadcast %1 : vector<128x1xf32> to vector<128x128xf32>
    %3 = vector.broadcast %0 : vector<1x128xf32> to vector<128x128xf32>
    %4 = arith.mulf %2, %3 : vector<128x128xf32>
    %c0_3 = arith.constant 0 : index
    %c0_4 = arith.constant 0 : index
    %5 = vector.load %arg3[%c0_3, %c0_4] : memref<128x1xf32, #tpu.memory_space<vmem>>, vector<128x1xf32>
    %6 = vector.broadcast %5 : vector<128x1xf32> to vector<128x128xf32>
    %7 = arith.addf %4, %6 : vector<128x128xf32>
    %cst = arith.constant 0.000000e+00 : f32
    %8 = vector.broadcast %cst : f32 to vector<128x128xf32>
    %9 = arith.maximumf %7, %8 : vector<128x128xf32>
    %c0_5 = arith.constant 0 : index
    %c0_6 = arith.constant 0 : index
    %10 = vector.load %arg4[%c0_5, %c0_6] : memref<128x128xbf16, #tpu.memory_space<vmem>>, vector<128x128xbf16>
    %11 = arith.truncf %9 : vector<128x128xf32> to vector<128x128xbf16>
    %cst_7 = arith.constant dense<0.000000e+00> : vector<128x128xf32>
    %12 = tpu.matmul %10, %11, %cst_7 {dimension_numbers = #tpu.dot_dimension_numbers<[1], [0], [0], [1], [0, 0, 1, 1], [], []>} : vector<128x128xbf16>, vector<128x128xbf16>, vector<128x128xf32> -> vector<128x128xf32>
    %c0_8 = arith.constant 0 : index
    %c0_9 = arith.constant 0 : index
    %13 = vector.load %arg5[%c0_8, %c0_9] : memref<128x1xf32, #tpu.memory_space<vmem>>, vector<128x1xf32>
    %14 = vector.broadcast %13 : vector<128x1xf32> to vector<128x128xf32>
    %15 = arith.addf %12, %14 : vector<128x128xf32>
    %cst_10 = arith.constant 0.000000e+00 : f32
    %16 = vector.broadcast %cst_10 : f32 to vector<128x128xf32>
    %17 = arith.maximumf %15, %16 : vector<128x128xf32>
    %c0_11 = arith.constant 0 : index
    %c0_12 = arith.constant 0 : index
    %18 = vector.load %arg6[%c0_11, %c0_12] : memref<128x128xbf16, #tpu.memory_space<vmem>>, vector<128x128xbf16>
    %19 = arith.truncf %17 : vector<128x128xf32> to vector<128x128xbf16>
    %cst_13 = arith.constant dense<0.000000e+00> : vector<128x128xf32>
    %20 = tpu.matmul %18, %19, %cst_13 {dimension_numbers = #tpu.dot_dimension_numbers<[1], [0], [0], [1], [0, 0, 1, 1], [], []>} : vector<128x128xbf16>, vector<128x128xbf16>, vector<128x128xf32> -> vector<128x128xf32>
    %c0_14 = arith.constant 0 : index
    %c0_15 = arith.constant 0 : index
    %21 = vector.load %arg7[%c0_14, %c0_15] : memref<128x1xf32, #tpu.memory_space<vmem>>, vector<128x1xf32>
    %22 = vector.broadcast %21 : vector<128x1xf32> to vector<128x128xf32>
    %23 = arith.addf %20, %22 : vector<128x128xf32>
    %cst_16 = arith.constant 0.000000e+00 : f32
    %24 = vector.broadcast %cst_16 : f32 to vector<128x128xf32>
    %25 = arith.maximumf %23, %24 : vector<128x128xf32>
    %c0_17 = arith.constant 0 : index
    %c0_18 = arith.constant 0 : index
    %26 = vector.load %arg8[%c0_17, %c0_18] : memref<128x128xbf16, #tpu.memory_space<vmem>>, vector<128x128xbf16>
    %27 = arith.truncf %25 : vector<128x128xf32> to vector<128x128xbf16>
    %cst_19 = arith.constant dense<0.000000e+00> : vector<128x128xf32>
    %28 = tpu.matmul %26, %27, %cst_19 {dimension_numbers = #tpu.dot_dimension_numbers<[1], [0], [0], [1], [0, 0, 1, 1], [], []>} : vector<128x128xbf16>, vector<128x128xbf16>, vector<128x128xf32> -> vector<128x128xf32>
    %c0_20 = arith.constant 0 : index
    %c0_21 = arith.constant 0 : index
    %29 = vector.load %arg9[%c0_20, %c0_21] : memref<128x1xf32, #tpu.memory_space<vmem>>, vector<128x1xf32>
    %30 = vector.broadcast %29 : vector<128x1xf32> to vector<128x128xf32>
    %31 = arith.addf %28, %30 : vector<128x128xf32>
    %cst_22 = arith.constant 0.000000e+00 : f32
    %32 = vector.broadcast %cst_22 : f32 to vector<128x128xf32>
    %33 = arith.maximumf %31, %32 : vector<128x128xf32>
    %c0_23 = arith.constant 0 : index
    %c0_24 = arith.constant 0 : index
    %34 = vector.load %arg10[%c0_23, %c0_24] : memref<1x128xbf16, #tpu.memory_space<vmem>>, vector<1x128xbf16>
    %35 = arith.truncf %33 : vector<128x128xf32> to vector<128x128xbf16>
    %cst_25 = arith.constant dense<0.000000e+00> : vector<1x128xf32>
    %36 = tpu.matmul %34, %35, %cst_25 {dimension_numbers = #tpu.dot_dimension_numbers<[1], [0], [0], [1], [0, 0, 1, 1], [], []>} : vector<1x128xbf16>, vector<128x128xbf16>, vector<1x128xf32> -> vector<1x128xf32>
    %c0_26 = arith.constant 0 : index
    %c0_27 = arith.constant 0 : index
    %37 = vector.load %arg11[%c0_26, %c0_27] : memref<1x1xf32, #tpu.memory_space<vmem>>, vector<1x1xf32>
    %38 = vector.broadcast %37 : vector<1x1xf32> to vector<1x128xf32>
    %39 = arith.addf %36, %38 : vector<1x128xf32>
    %c0_28 = arith.constant 0 : index
    %c0_29 = arith.constant 0 : index
    %40 = vector.load %arg12[%c0_28, %c0_29] : memref<1x128xf32, #tpu.memory_space<vmem>>, vector<1x128xf32>
    tpu.vector_store %arg12[%c0_28, %c0_29], %39 {strides = array<i32>} : memref<1x128xf32, #tpu.memory_space<vmem>>, vector<1x128xf32>,
    return
  }
  func.func @transform_0(%arg0: i32) -> (i32, i32) {
    %c0_i32 = arith.constant 0 : i32
    %c0_i32_0 = arith.constant 0 : i32
    return %c0_i32, %arg0 : i32, i32
  }
  func.func @transform_1(%arg0: i32) -> (i32, i32) {
    %c0_i32 = arith.constant 0 : i32
    %c0_i32_0 = arith.constant 0 : i32
    %c0_i32_1 = arith.constant 0 : i32
    return %c0_i32, %c0_i32_0 : i32, i32
  }
  func.func @transform_2(%arg0: i32) -> (i32, i32) {
    %c0_i32 = arith.constant 0 : i32
    %c0_i32_0 = arith.constant 0 : i32
    %c0_i32_1 = arith.constant 0 : i32
    return %c0_i32, %c0_i32_0 : i32, i32
  }
  func.func @transform_3(%arg0: i32) -> (i32, i32) {
    %c0_i32 = arith.constant 0 : i32
    %c0_i32_0 = arith.constant 0 : i32
    %c0_i32_1 = arith.constant 0 : i32
    return %c0_i32, %c0_i32_0 : i32, i32
  }
  func.func @transform_4(%arg0: i32) -> (i32, i32) {
    %c0_i32 = arith.constant 0 : i32
    %c0_i32_0 = arith.constant 0 : i32
    %c0_i32_1 = arith.constant 0 : i32
    return %c0_i32, %c0_i32_0 : i32, i32
  }
  func.func @transform_5(%arg0: i32) -> (i32, i32) {
    %c0_i32 = arith.constant 0 : i32
    %c0_i32_0 = arith.constant 0 : i32
    %c0_i32_1 = arith.constant 0 : i32
    return %c0_i32, %c0_i32_0 : i32, i32
  }
  func.func @transform_6(%arg0: i32) -> (i32, i32) {
    %c0_i32 = arith.constant 0 : i32
    %c0_i32_0 = arith.constant 0 : i32
    %c0_i32_1 = arith.constant 0 : i32
    return %c0_i32, %c0_i32_0 : i32, i32
  }
  func.func @transform_7(%arg0: i32) -> (i32, i32) {
    %c0_i32 = arith.constant 0 : i32
    %c0_i32_0 = arith.constant 0 : i32
    %c0_i32_1 = arith.constant 0 : i32
    return %c0_i32, %c0_i32_0 : i32, i32
  }
  func.func @transform_8(%arg0: i32) -> (i32, i32) {
    %c0_i32 = arith.constant 0 : i32
    %c0_i32_0 = arith.constant 0 : i32
    %c0_i32_1 = arith.constant 0 : i32
    return %c0_i32, %c0_i32_0 : i32, i32
  }
  func.func @transform_9(%arg0: i32) -> (i32, i32) {
    %c0_i32 = arith.constant 0 : i32
    %c0_i32_0 = arith.constant 0 : i32
    %c0_i32_1 = arith.constant 0 : i32
    return %c0_i32, %c0_i32_0 : i32, i32
  }
  func.func @transform_10(%arg0: i32) -> (i32, i32) {
    %c0_i32 = arith.constant 0 : i32
    %c0_i32_0 = arith.constant 0 : i32
    %c0_i32_1 = arith.constant 0 : i32
    return %c0_i32, %c0_i32_0 : i32, i32
  }
  func.func @transform_11(%arg0: i32) -> (i32, i32) {
    %c0_i32 = arith.constant 0 : i32
    %c0_i32_0 = arith.constant 0 : i32
    return %c0_i32, %arg0 : i32, i32
  }
}

</mosaic_0001>

<llo_original>
// kernel: fcnn_forward.1
$region0: #{fcnn_forward.1}
  #allocation0 [shape = 'u32[]', space=smem, size = 0x4, offset = 0x4, fixed_abs, tag = 'smem constant byte address 0x4 - core index']
  #allocation1 [shape = 'u32[144,128]{1,0:T(1,128)}', space=vmem, size = 0x12000, scoped, tag = 'internal scratch']
  #allocation2 [shape = 'f32[1,1]{1,0:T(1,128)S(1)}', space=vmem, size = 0x200, scoped, tag = 'scoped memory for fcnn_forward.1']
  %s0 = inlined_call_operand.vmem [shape: f32[1,128], index: 0, kind: input, shape index: {}]
  %s1 = inlined_call_operand.vmem [shape: f32[128,1], index: 1, kind: input, shape index: {}]
  %s2 = inlined_call_operand.vmem [shape: f32[128,1], index: 2, kind: input, shape index: {}]
  %s3 = inlined_call_operand.vmem [shape: bf16[128,128], index: 3, kind: input, shape index: {}]
  %s4 = inlined_call_operand.vmem [shape: f32[128,1], index: 4, kind: input, shape index: {}]
  %s5 = inlined_call_operand.vmem [shape: bf16[128,128], index: 5, kind: input, shape index: {}]
  %s6 = inlined_call_operand.vmem [shape: f32[128,1], index: 6, kind: input, shape index: {}]
  %s7 = inlined_call_operand.vmem [shape: bf16[128,128], index: 7, kind: input, shape index: {}]
  %s8 = inlined_call_operand.vmem [shape: f32[128,1], index: 8, kind: input, shape index: {}]
  %s9 = inlined_call_operand.vmem [shape: bf16[1,128], index: 9, kind: input, shape index: {}]
  %s10 = inlined_call_operand.<no memory space> [shape: f32[1,1], index: 10, kind: input, shape index: {}]
  %s11 = inlined_call_operand.vmem [shape: f32[1,128], index: 11, kind: output, shape index: {}]
  %s12 = sld [smem:[#allocation0]]
  $region54: #{fcnn_forward.1} parent=0
    _
  %s14 = ssub.s32 1, %s12
  %s15 = scalar_select 0, %s14, %s12
  %v16 = vstv %s10
  %17 = vst [vmem:[#allocation2] sm:$0x1] %v16
  // Predicated region
  $region2: #{fcnn_forward.1} parent=0 // pred_check
    _
  $region3: #{fcnn_forward.1} parent=0 // pred_check_branch
    %19 = sbr.rel (0) target = $region5
  $region4: #{fcnn_forward.1} parent=0 // pred_region
    _
  $region5: #{fcnn_forward.1} parent=0 // pred_fallthru
    _
  // Predicated region
  $region6: #{fcnn_forward.1} parent=0 // pred_check
    _
  $region7: #{fcnn_forward.1} parent=0 // pred_check_branch
    %21 = sbr.rel (0) target = $region9
  $region8: #{fcnn_forward.1} parent=0 // pred_region
    _
  $region9: #{fcnn_forward.1} parent=0 // pred_fallthru
    _
  // Predicated region
  $region10: #{fcnn_forward.1} parent=0 // pred_check
    _
  $region11: #{fcnn_forward.1} parent=0 // pred_check_branch
    %23 = sbr.rel (0) target = $region13
  $region12: #{fcnn_forward.1} parent=0 // pred_region
    _
  $region13: #{fcnn_forward.1} parent=0 // pred_fallthru
    _
  // Predicated region
  $region14: #{fcnn_forward.1} parent=0 // pred_check
    _
  $region15: #{fcnn_forward.1} parent=0 // pred_check_branch
    %25 = sbr.rel (0) target = $region17
  $region16: #{fcnn_forward.1} parent=0 // pred_region
    _
  $region17: #{fcnn_forward.1} parent=0 // pred_fallthru
    _
  // Predicated region
  $region18: #{fcnn_forward.1} parent=0 // pred_check
    _
  $region19: #{fcnn_forward.1} parent=0 // pred_check_branch
    %27 = sbr.rel (0) target = $region21
  $region20: #{fcnn_forward.1} parent=0 // pred_region
    _
  $region21: #{fcnn_forward.1} parent=0 // pred_fallthru
    _
  // Predicated region
  $region22: #{fcnn_forward.1} parent=0 // pred_check
    _
  $region23: #{fcnn_forward.1} parent=0 // pred_check_branch
    %29 = sbr.rel (0) target = $region25
  $region24: #{fcnn_forward.1} parent=0 // pred_region
    _
  $region25: #{fcnn_forward.1} parent=0 // pred_fallthru
    _
  // Predicated region
  $region26: #{fcnn_forward.1} parent=0 // pred_check
    _
  $region27: #{fcnn_forward.1} parent=0 // pred_check_branch
    %31 = sbr.rel (0) target = $region29
  $region28: #{fcnn_forward.1} parent=0 // pred_region
    _
  $region29: #{fcnn_forward.1} parent=0 // pred_fallthru
    _
  // Predicated region
  $region30: #{fcnn_forward.1} parent=0 // pred_check
    _
  $region31: #{fcnn_forward.1} parent=0 // pred_check_branch
    %33 = sbr.rel (0) target = $region33
  $region32: #{fcnn_forward.1} parent=0 // pred_region
    _
  $region33: #{fcnn_forward.1} parent=0 // pred_fallthru
    _
  // Predicated region
  $region34: #{fcnn_forward.1} parent=0 // pred_check
    _
  $region35: #{fcnn_forward.1} parent=0 // pred_check_branch
    %35 = sbr.rel (0) target = $region37
  $region36: #{fcnn_forward.1} parent=0 // pred_region
    _
  $region37: #{fcnn_forward.1} parent=0 // pred_fallthru
    _
  // Predicated region
  $region38: #{fcnn_forward.1} parent=0 // pred_check
    _
  $region39: #{fcnn_forward.1} parent=0 // pred_check_branch
    %37 = sbr.rel (0) target = $region41
  $region40: #{fcnn_forward.1} parent=0 // pred_region
    _
  $region41: #{fcnn_forward.1} parent=0 // pred_fallthru
    _
  // Predicated region
  $region42: #{fcnn_forward.1} parent=0 // pred_check
    _
  $region43: #{fcnn_forward.1} parent=0 // pred_check_branch
    %39 = sbr.rel (0) target = $region45
  $region44: #{fcnn_forward.1} parent=0 // pred_region
    _
  $region45: #{fcnn_forward.1} parent=0 // pred_fallthru
    _
  %v41 = vld [vmem:[%s0] sm:$0x1]
  %v42 = vld [vmem:[%s1] sm:$0xff]
  %v43 = vld [vmem:[%s1 + $0x8] sm:$0xff]
  %v44 = vld [vmem:[%s1 + $0x10] sm:$0xff]
  %v45 = vld [vmem:[%s1 + $0x18] sm:$0xff]
  %v46 = vld [vmem:[%s1 + $0x20] sm:$0xff]
  %v47 = vld [vmem:[%s1 + $0x28] sm:$0xff]
  %v48 = vld [vmem:[%s1 + $0x30] sm:$0xff]
  %v49 = vld [vmem:[%s1 + $0x38] sm:$0xff]
  %v50 = vld [vmem:[%s1 + $0x40] sm:$0xff]
  %v51 = vld [vmem:[%s1 + $0x48] sm:$0xff]
  %v52 = vld [vmem:[%s1 + $0x50] sm:$0xff]
  %v53 = vld [vmem:[%s1 + $0x58] sm:$0xff]
  %v54 = vld [vmem:[%s1 + $0x60] sm:$0xff]
  %v55 = vld [vmem:[%s1 + $0x68] sm:$0xff]
  %v56 = vld [vmem:[%s1 + $0x70] sm:$0xff]
  %v57 = vld [vmem:[%s1 + $0x78] sm:$0xff]
  %59 = vset.pattern.permute.xlu0 0
  %60 = vperm.xlu0 %59, %v42
  %v61 = vpop.permute.xlu0 %60
  %64 = vset.pattern.permute.xlu0 0
  %65 = vperm.xlu0 %64, %v43
  %v66 = vpop.permute.xlu0 %65
  %69 = vset.pattern.permute.xlu0 0
  %70 = vperm.xlu0 %69, %v44
  %v71 = vpop.permute.xlu0 %70
  %74 = vset.pattern.permute.xlu0 0
  %75 = vperm.xlu0 %74, %v45
  %v76 = vpop.permute.xlu0 %75
  %79 = vset.pattern.permute.xlu0 0
  %80 = vperm.xlu0 %79, %v46
  %v81 = vpop.permute.xlu0 %80
  %84 = vset.pattern.permute.xlu0 0
  %85 = vperm.xlu0 %84, %v47
  %v86 = vpop.permute.xlu0 %85
  %89 = vset.pattern.permute.xlu0 0
  %90 = vperm.xlu0 %89, %v48
  %v91 = vpop.permute.xlu0 %90
  %94 = vset.pattern.permute.xlu0 0
  %95 = vperm.xlu0 %94, %v49
  %v96 = vpop.permute.xlu0 %95
  %99 = vset.pattern.permute.xlu0 0
  %100 = vperm.xlu0 %99, %v50
  %v101 = vpop.permute.xlu0 %100
  %104 = vset.pattern.permute.xlu0 0
  %105 = vperm.xlu0 %104, %v51
  %v106 = vpop.permute.xlu0 %105
  %109 = vset.pattern.permute.xlu0 0
  %110 = vperm.xlu0 %109, %v52
  %v111 = vpop.permute.xlu0 %110
  %114 = vset.pattern.permute.xlu0 0
  %115 = vperm.xlu0 %114, %v53
  %v116 = vpop.permute.xlu0 %115
  %119 = vset.pattern.permute.xlu0 0
  %120 = vperm.xlu0 %119, %v54
  %v121 = vpop.permute.xlu0 %120
  %124 = vset.pattern.permute.xlu0 0
  %125 = vperm.xlu0 %124, %v55
  %v126 = vpop.permute.xlu0 %125
  %129 = vset.pattern.permute.xlu0 0
  %130 = vperm.xlu0 %129, %v56
  %v131 = vpop.permute.xlu0 %130
  %134 = vset.pattern.permute.xlu0 0
  %135 = vperm.xlu0 %134, %v57
  %v136 = vpop.permute.xlu0 %135
  %v139 = vlaneseq
  %v140 = vshrl.u32 %v139, 7
  %v141 = vsub.s32 0, %v140
  %v142 = vrot.slane %v41, %v141
  %v144 = vmul.f32 %v61, %v142
  %v145 = vmul.f32 %v66, %v142
  %v146 = vmul.f32 %v71, %v142
  %v147 = vmul.f32 %v76, %v142
  %v148 = vmul.f32 %v81, %v142
  %v149 = vmul.f32 %v86, %v142
  %v150 = vmul.f32 %v91, %v142
  %v151 = vmul.f32 %v96, %v142
  %v152 = vmul.f32 %v101, %v142
  %v153 = vmul.f32 %v106, %v142
  %v154 = vmul.f32 %v111, %v142
  %v155 = vmul.f32 %v116, %v142
  %v156 = vmul.f32 %v121, %v142
  %v157 = vmul.f32 %v126, %v142
  %v158 = vmul.f32 %v131, %v142
  %v159 = vmul.f32 %v136, %v142
  %v160 = vld [vmem:[%s2] sm:$0xff]
  %v161 = vld [vmem:[%s2 + $0x8] sm:$0xff]
  %v162 = vld [vmem:[%s2 + $0x10] sm:$0xff]
  %v163 = vld [vmem:[%s2 + $0x18] sm:$0xff]
  %v164 = vld [vmem:[%s2 + $0x20] sm:$0xff]
  %v165 = vld [vmem:[%s2 + $0x28] sm:$0xff]
  %v166 = vld [vmem:[%s2 + $0x30] sm:$0xff]
  %v167 = vld [vmem:[%s2 + $0x38] sm:$0xff]
  %v168 = vld [vmem:[%s2 + $0x40] sm:$0xff]
  %v169 = vld [vmem:[%s2 + $0x48] sm:$0xff]
  %v170 = vld [vmem:[%s2 + $0x50] sm:$0xff]
  %v171 = vld [vmem:[%s2 + $0x58] sm:$0xff]
  %v172 = vld [vmem:[%s2 + $0x60] sm:$0xff]
  %v173 = vld [vmem:[%s2 + $0x68] sm:$0xff]
  %v174 = vld [vmem:[%s2 + $0x70] sm:$0xff]
  %v175 = vld [vmem:[%s2 + $0x78] sm:$0xff]
  %177 = vset.pattern.permute.xlu0 0
  %178 = vperm.xlu0 %177, %v160
  %v179 = vpop.permute.xlu0 %178
  %182 = vset.pattern.permute.xlu0 0
  %183 = vperm.xlu0 %182, %v161
  %v184 = vpop.permute.xlu0 %183
  %187 = vset.pattern.permute.xlu0 0
  %188 = vperm.xlu0 %187, %v162
  %v189 = vpop.permute.xlu0 %188
  %192 = vset.pattern.permute.xlu0 0
  %193 = vperm.xlu0 %192, %v163
  %v194 = vpop.permute.xlu0 %193
  %197 = vset.pattern.permute.xlu0 0
  %198 = vperm.xlu0 %197, %v164
  %v199 = vpop.permute.xlu0 %198
  %202 = vset.pattern.permute.xlu0 0
  %203 = vperm.xlu0 %202, %v165
  %v204 = vpop.permute.xlu0 %203
  %207 = vset.pattern.permute.xlu0 0
  %208 = vperm.xlu0 %207, %v166
  %v209 = vpop.permute.xlu0 %208
  %212 = vset.pattern.permute.xlu0 0
  %213 = vperm.xlu0 %212, %v167
  %v214 = vpop.permute.xlu0 %213
  %217 = vset.pattern.permute.xlu0 0
  %218 = vperm.xlu0 %217, %v168
  %v219 = vpop.permute.xlu0 %218
  %222 = vset.pattern.permute.xlu0 0
  %223 = vperm.xlu0 %222, %v169
  %v224 = vpop.permute.xlu0 %223
  %227 = vset.pattern.permute.xlu0 0
  %228 = vperm.xlu0 %227, %v170
  %v229 = vpop.permute.xlu0 %228
  %232 = vset.pattern.permute.xlu0 0
  %233 = vperm.xlu0 %232, %v171
  %v234 = vpop.permute.xlu0 %233
  %237 = vset.pattern.permute.xlu0 0
  %238 = vperm.xlu0 %237, %v172
  %v239 = vpop.permute.xlu0 %238
  %242 = vset.pattern.permute.xlu0 0
  %243 = vperm.xlu0 %242, %v173
  %v244 = vpop.permute.xlu0 %243
  %247 = vset.pattern.permute.xlu0 0
  %248 = vperm.xlu0 %247, %v174
  %v249 = vpop.permute.xlu0 %248
  %252 = vset.pattern.permute.xlu0 0
  %253 = vperm.xlu0 %252, %v175
  %v254 = vpop.permute.xlu0 %253
  %v256 = vadd.f32 %v144, %v179
  %v257 = vadd.f32 %v145, %v184
  %v258 = vadd.f32 %v146, %v189
  %v259 = vadd.f32 %v147, %v194
  %v260 = vadd.f32 %v148, %v199
  %v261 = vadd.f32 %v149, %v204
  %v262 = vadd.f32 %v150, %v209
  %v263 = vadd.f32 %v151, %v214
  %v264 = vadd.f32 %v152, %v219
  %v265 = vadd.f32 %v153, %v224
  %v266 = vadd.f32 %v154, %v229
  %v267 = vadd.f32 %v155, %v234
  %v268 = vadd.f32 %v156, %v239
  %v269 = vadd.f32 %v157, %v244
  %v270 = vadd.f32 %v158, %v249
  %v271 = vadd.f32 %v159, %v254
  %v272 = vmax.f32 %v256, 0.0
  %v273 = vmax.f32 %v257, 0.0
  %v274 = vmax.f32 %v258, 0.0
  %v275 = vmax.f32 %v259, 0.0
  %v276 = vmax.f32 %v260, 0.0
  %v277 = vmax.f32 %v261, 0.0
  %v278 = vmax.f32 %v262, 0.0
  %v279 = vmax.f32 %v263, 0.0
  %v280 = vmax.f32 %v264, 0.0
  %v281 = vmax.f32 %v265, 0.0
  %v282 = vmax.f32 %v266, 0.0
  %v283 = vmax.f32 %v267, 0.0
  %v284 = vmax.f32 %v268, 0.0
  %v285 = vmax.f32 %v269, 0.0
  %v286 = vmax.f32 %v270, 0.0
  %v287 = vmax.f32 %v271, 0.0
  %v288 = vld [vmem:[%s3] sm:$0xf]
  %v289 = vld [vmem:[%s3 + $0x4] sm:$0xf]
  %v290 = vld [vmem:[%s3 + $0x8] sm:$0xf]
  %v291 = vld [vmem:[%s3 + $0xc] sm:$0xf]
  %v292 = vld [vmem:[%s3 + $0x10] sm:$0xf]
  %v293 = vld [vmem:[%s3 + $0x14] sm:$0xf]
  %v294 = vld [vmem:[%s3 + $0x18] sm:$0xf]
  %v295 = vld [vmem:[%s3 + $0x1c] sm:$0xf]
  %v296 = vld [vmem:[%s3 + $0x20] sm:$0xf]
  %v297 = vld [vmem:[%s3 + $0x24] sm:$0xf]
  %v298 = vld [vmem:[%s3 + $0x28] sm:$0xf]
  %v299 = vld [vmem:[%s3 + $0x2c] sm:$0xf]
  %v300 = vld [vmem:[%s3 + $0x30] sm:$0xf]
  %v301 = vld [vmem:[%s3 + $0x34] sm:$0xf]
  %v302 = vld [vmem:[%s3 + $0x38] sm:$0xf]
  %v303 = vld [vmem:[%s3 + $0x3c] sm:$0xf]
  %v304 = vpack.c.bf16 %v273, %v272
  %v305 = vpack.c.bf16 %v275, %v274
  %v306 = vpack.c.bf16 %v277, %v276
  %v307 = vpack.c.bf16 %v279, %v278
  %v308 = vpack.c.bf16 %v281, %v280
  %v309 = vpack.c.bf16 %v283, %v282
  %v310 = vpack.c.bf16 %v285, %v284
  %v311 = vpack.c.bf16 %v287, %v286
  %v312 = vld [vmem:[%s4] sm:$0xff]
  %v313 = vld [vmem:[%s4 + $0x8] sm:$0xff]
  %v314 = vld [vmem:[%s4 + $0x10] sm:$0xff]
  %v315 = vld [vmem:[%s4 + $0x18] sm:$0xff]
  %v316 = vld [vmem:[%s4 + $0x20] sm:$0xff]
  %v317 = vld [vmem:[%s4 + $0x28] sm:$0xff]
  %v318 = vld [vmem:[%s4 + $0x30] sm:$0xff]
  %v319 = vld [vmem:[%s4 + $0x38] sm:$0xff]
  %v320 = vld [vmem:[%s4 + $0x40] sm:$0xff]
  %v321 = vld [vmem:[%s4 + $0x48] sm:$0xff]
  %v322 = vld [vmem:[%s4 + $0x50] sm:$0xff]
  %v323 = vld [vmem:[%s4 + $0x58] sm:$0xff]
  %v324 = vld [vmem:[%s4 + $0x60] sm:$0xff]
  %v325 = vld [vmem:[%s4 + $0x68] sm:$0xff]
  %v326 = vld [vmem:[%s4 + $0x70] sm:$0xff]
  %v327 = vld [vmem:[%s4 + $0x78] sm:$0xff]
  %329 = vset.pattern.permute.xlu0 0
  %330 = vperm.xlu0 %329, %v312
  %v331 = vpop.permute.xlu0 %330
  %334 = vset.pattern.permute.xlu0 0
  %335 = vperm.xlu0 %334, %v313
  %v336 = vpop.permute.xlu0 %335
  %339 = vset.pattern.permute.xlu0 0
  %340 = vperm.xlu0 %339, %v314
  %v341 = vpop.permute.xlu0 %340
  %344 = vset.pattern.permute.xlu0 0
  %345 = vperm.xlu0 %344, %v315
  %v346 = vpop.permute.xlu0 %345
  %349 = vset.pattern.permute.xlu0 0
  %350 = vperm.xlu0 %349, %v316
  %v351 = vpop.permute.xlu0 %350
  %354 = vset.pattern.permute.xlu0 0
  %355 = vperm.xlu0 %354, %v317
  %v356 = vpop.permute.xlu0 %355
  %359 = vset.pattern.permute.xlu0 0
  %360 = vperm.xlu0 %359, %v318
  %v361 = vpop.permute.xlu0 %360
  %364 = vset.pattern.permute.xlu0 0
  %365 = vperm.xlu0 %364, %v319
  %v366 = vpop.permute.xlu0 %365
  %369 = vset.pattern.permute.xlu0 0
  %370 = vperm.xlu0 %369, %v320
  %v371 = vpop.permute.xlu0 %370
  %374 = vset.pattern.permute.xlu0 0
  %375 = vperm.xlu0 %374, %v321
  %v376 = vpop.permute.xlu0 %375
  %379 = vset.pattern.permute.xlu0 0
  %380 = vperm.xlu0 %379, %v322
  %v381 = vpop.permute.xlu0 %380
  %384 = vset.pattern.permute.xlu0 0
  %385 = vperm.xlu0 %384, %v323
  %v386 = vpop.permute.xlu0 %385
  %389 = vset.pattern.permute.xlu0 0
  %390 = vperm.xlu0 %389, %v324
  %v391 = vpop.permute.xlu0 %390
  %394 = vset.pattern.permute.xlu0 0
  %395 = vperm.xlu0 %394, %v325
  %v396 = vpop.permute.xlu0 %395
  %399 = vset.pattern.permute.xlu0 0
  %400 = vperm.xlu0 %399, %v326
  %v401 = vpop.permute.xlu0 %400
  %404 = vset.pattern.permute.xlu0 0
  %405 = vperm.xlu0 %404, %v327
  %v406 = vpop.permute.xlu0 %405
  %v424 = vunpack.c.l.b16 %v288
  %v425 = vunpack.c.l.b16 %v289
  %v426 = vunpack.c.l.b16 %v290
  %v427 = vunpack.c.l.b16 %v291
  %v428 = vunpack.c.l.b16 %v292
  %v429 = vunpack.c.l.b16 %v293
  %v430 = vunpack.c.l.b16 %v294
  %v431 = vunpack.c.l.b16 %v295
  %v432 = vunpack.c.l.b16 %v296
  %v433 = vunpack.c.l.b16 %v297
  %v434 = vunpack.c.l.b16 %v298
  %v435 = vunpack.c.l.b16 %v299
  %v436 = vunpack.c.l.b16 %v300
  %v437 = vunpack.c.l.b16 %v301
  %v438 = vunpack.c.l.b16 %v302
  %v439 = vunpack.c.l.b16 %v303
  %v440 = vpack.c.b16 %v425, %v424
  %v441 = vpack.c.b16 %v427, %v426
  %v442 = vpack.c.b16 %v429, %v428
  %v443 = vpack.c.b16 %v431, %v430
  %v444 = vpack.c.b16 %v433, %v432
  %v445 = vpack.c.b16 %v435, %v434
  %v446 = vpack.c.b16 %v437, %v436
  %v447 = vpack.c.b16 %v439, %v438
  %456 = vmatprep.subr.bf16.mxu0 0
  %457 = vmatpush1.bf16.msra.mxu0 %v304
  %458 = vmatprep.subr.bf16.mxu0 0
  %459 = vmatpush1.bf16.msra.mxu0 %v305
  %460 = vmatprep.subr.bf16.mxu0 0
  %461 = vmatpush1.bf16.msra.mxu0 %v306
  %462 = vmatprep.subr.bf16.mxu0 0
  %463 = vmatpush1.bf16.msra.mxu0 %v307
  %464 = vmatprep.subr.bf16.mxu0 0
  %465 = vmatpush1.bf16.msra.mxu0 %v308
  %466 = vmatprep.subr.bf16.mxu0 0
  %467 = vmatpush1.bf16.msra.mxu0 %v309
  %468 = vmatprep.subr.bf16.mxu0 0
  %469 = vmatpush1.bf16.msra.mxu0 %v310
  %470 = vmatprep.subr.bf16.mxu0 0
  %471 = vmatpush1.bf16.msra.mxu0 %v311
  %472 = vmatprep.subr.bf16.mxu0 0
  %473 = vmatpush1.bf16.msra.mxu0 0
  %474 = vmatprep.subr.bf16.mxu0 0
  %475 = vmatpush1.bf16.msra.mxu0 0
  %476 = vmatprep.subr.bf16.mxu0 0
  %477 = vmatpush1.bf16.msra.mxu0 0
  %478 = vmatprep.subr.bf16.mxu0 0
  %479 = vmatpush1.bf16.msra.mxu0 0
  %480 = vmatprep.subr.bf16.mxu0 0
  %481 = vmatpush1.bf16.msra.mxu0 0
  %482 = vmatprep.subr.bf16.mxu0 0
  %483 = vmatpush1.bf16.msra.mxu0 0
  %484 = vmatprep.subr.bf16.mxu0 0
  %485 = vmatpush1.bf16.msra.mxu0 0
  %486 = vmatprep.subr.bf16.mxu0 0
  %487 = vmatpush1.bf16.msra.mxu0 0
  %488 = vmatprep.mubr.bf16.mxu0 0
  %489 = vmatmul.mubr.bf16.gmra.mrb[0].mxu0 %v440
  %v490 = vpop.f32.mrb[0].mxu0
  %v491 = vadd.f32 %v331, %v490
  %v492 = vpop.f32.mrb[0].mxu0
  %v493 = vpop.f32.mrb[0].mxu0
  %v494 = vadd.f32 %v336, %v493
  %v495 = vpop.f32.mrb[0].mxu0
  %496 = vmatprep.mubr.bf16.mxu0 0
  %497 = vmatmul.mubr.bf16.gmra.mrb[0].mxu0 %v441
  %v498 = vpop.f32.mrb[0].mxu0
  %v499 = vadd.f32 %v341, %v498
  %v500 = vpop.f32.mrb[0].mxu0
  %v501 = vpop.f32.mrb[0].mxu0
  %v502 = vadd.f32 %v346, %v501
  %v503 = vpop.f32.mrb[0].mxu0
  %504 = vmatprep.mubr.bf16.mxu0 0
  %505 = vmatmul.mubr.bf16.gmra.mrb[0].mxu0 %v442
  %v506 = vpop.f32.mrb[0].mxu0
  %v507 = vadd.f32 %v351, %v506
  %v508 = vpop.f32.mrb[0].mxu0
  %v509 = vpop.f32.mrb[0].mxu0
  %v510 = vadd.f32 %v356, %v509
  %v511 = vpop.f32.mrb[0].mxu0
  %512 = vmatprep.mubr.bf16.mxu0 0
  %513 = vmatmul.mubr.bf16.gmra.mrb[0].mxu0 %v443
  %v514 = vpop.f32.mrb[0].mxu0
  %v515 = vadd.f32 %v361, %v514
  %v516 = vpop.f32.mrb[0].mxu0
  %v517 = vpop.f32.mrb[0].mxu0
  %v518 = vadd.f32 %v366, %v517
  %v519 = vpop.f32.mrb[0].mxu0
  %520 = vmatprep.mubr.bf16.mxu0 0
  %521 = vmatmul.mubr.bf16.gmra.mrb[0].mxu0 %v444
  %v522 = vpop.f32.mrb[0].mxu0
  %v523 = vadd.f32 %v371, %v522
  %v524 = vpop.f32.mrb[0].mxu0
  %v525 = vpop.f32.mrb[0].mxu0
  %v526 = vadd.f32 %v376, %v525
  %v527 = vpop.f32.mrb[0].mxu0
  %528 = vmatprep.mubr.bf16.mxu0 0
  %529 = vmatmul.mubr.bf16.gmra.mrb[0].mxu0 %v445
  %v530 = vpop.f32.mrb[0].mxu0
  %v531 = vadd.f32 %v381, %v530
  %v532 = vpop.f32.mrb[0].mxu0
  %v533 = vpop.f32.mrb[0].mxu0
  %v534 = vadd.f32 %v386, %v533
  %v535 = vpop.f32.mrb[0].mxu0
  %536 = vmatprep.mubr.bf16.mxu0 0
  %537 = vmatmul.mubr.bf16.gmra.mrb[0].mxu0 %v446
  %v538 = vpop.f32.mrb[0].mxu0
  %v539 = vadd.f32 %v391, %v538
  %v540 = vpop.f32.mrb[0].mxu0
  %v541 = vpop.f32.mrb[0].mxu0
  %v542 = vadd.f32 %v396, %v541
  %v543 = vpop.f32.mrb[0].mxu0
  %544 = vmatprep.mubr.bf16.mxu0 0
  %545 = vmatmul.mubr.bf16.gmra.mrb[0].mxu0 %v447
  %v546 = vpop.f32.mrb[0].mxu0
  %v547 = vadd.f32 %v401, %v546
  %v548 = vpop.f32.mrb[0].mxu0
  %v549 = vpop.f32.mrb[0].mxu0
  %v550 = vadd.f32 %v406, %v549
  %v551 = vpop.f32.mrb[0].mxu0
  %552 = vdwg.mxu0
  %v553 = vmax.f32 %v491, 0.0
  %v554 = vmax.f32 %v494, 0.0
  %v555 = vmax.f32 %v499, 0.0
  %v556 = vmax.f32 %v502, 0.0
  %v557 = vmax.f32 %v507, 0.0
  %v558 = vmax.f32 %v510, 0.0
  %v559 = vmax.f32 %v515, 0.0
  %v560 = vmax.f32 %v518, 0.0
  %v561 = vmax.f32 %v523, 0.0
  %v562 = vmax.f32 %v526, 0.0
  %v563 = vmax.f32 %v531, 0.0
  %v564 = vmax.f32 %v534, 0.0
  %v565 = vmax.f32 %v539, 0.0
  %v566 = vmax.f32 %v542, 0.0
  %v567 = vmax.f32 %v547, 0.0
  %v568 = vmax.f32 %v550, 0.0
  %v569 = vld [vmem:[%s5] sm:$0xf]
  %v570 = vld [vmem:[%s5 + $0x4] sm:$0xf]
  %v571 = vld [vmem:[%s5 + $0x8] sm:$0xf]
  %v572 = vld [vmem:[%s5 + $0xc] sm:$0xf]
  %v573 = vld [vmem:[%s5 + $0x10] sm:$0xf]
  %v574 = vld [vmem:[%s5 + $0x14] sm:$0xf]
  %v575 = vld [vmem:[%s5 + $0x18] sm:$0xf]
  %v576 = vld [vmem:[%s5 + $0x1c] sm:$0xf]
  %v577 = vld [vmem:[%s5 + $0x20] sm:$0xf]
  %v578 = vld [vmem:[%s5 + $0x24] sm:$0xf]
  %v579 = vld [vmem:[%s5 + $0x28] sm:$0xf]
  %v580 = vld [vmem:[%s5 + $0x2c] sm:$0xf]
  %v581 = vld [vmem:[%s5 + $0x30] sm:$0xf]
  %v582 = vld [vmem:[%s5 + $0x34] sm:$0xf]
  %v583 = vld [vmem:[%s5 + $0x38] sm:$0xf]
  %v584 = vld [vmem:[%s5 + $0x3c] sm:$0xf]
  %v585 = vpack.c.bf16 %v554, %v553
  %v586 = vpack.c.bf16 %v556, %v555
  %v587 = vpack.c.bf16 %v558, %v557
  %v588 = vpack.c.bf16 %v560, %v559
  %v589 = vpack.c.bf16 %v562, %v561
  %v590 = vpack.c.bf16 %v564, %v563
  %v591 = vpack.c.bf16 %v566, %v565
  %v592 = vpack.c.bf16 %v568, %v567
  %v593 = vld [vmem:[%s6] sm:$0xff]
  %v594 = vld [vmem:[%s6 + $0x8] sm:$0xff]
  %v595 = vld [vmem:[%s6 + $0x10] sm:$0xff]
  %v596 = vld [vmem:[%s6 + $0x18] sm:$0xff]
  %v597 = vld [vmem:[%s6 + $0x20] sm:$0xff]
  %v598 = vld [vmem:[%s6 + $0x28] sm:$0xff]
  %v599 = vld [vmem:[%s6 + $0x30] sm:$0xff]
  %v600 = vld [vmem:[%s6 + $0x38] sm:$0xff]
  %v601 = vld [vmem:[%s6 + $0x40] sm:$0xff]
  %v602 = vld [vmem:[%s6 + $0x48] sm:$0xff]
  %v603 = vld [vmem:[%s6 + $0x50] sm:$0xff]
  %v604 = vld [vmem:[%s6 + $0x58] sm:$0xff]
  %v605 = vld [vmem:[%s6 + $0x60] sm:$0xff]
  %v606 = vld [vmem:[%s6 + $0x68] sm:$0xff]
  %v607 = vld [vmem:[%s6 + $0x70] sm:$0xff]
  %v608 = vld [vmem:[%s6 + $0x78] sm:$0xff]
  %610 = vset.pattern.permute.xlu0 0
  %611 = vperm.xlu0 %610, %v593
  %v612 = vpop.permute.xlu0 %611
  %615 = vset.pattern.permute.xlu0 0
  %616 = vperm.xlu0 %615, %v594
  %v617 = vpop.permute.xlu0 %616
  %620 = vset.pattern.permute.xlu0 0
  %621 = vperm.xlu0 %620, %v595
  %v622 = vpop.permute.xlu0 %621
  %625 = vset.pattern.permute.xlu0 0
  %626 = vperm.xlu0 %625, %v596
  %v627 = vpop.permute.xlu0 %626
  %630 = vset.pattern.permute.xlu0 0
  %631 = vperm.xlu0 %630, %v597
  %v632 = vpop.permute.xlu0 %631
  %635 = vset.pattern.permute.xlu0 0
  %636 = vperm.xlu0 %635, %v598
  %v637 = vpop.permute.xlu0 %636
  %640 = vset.pattern.permute.xlu0 0
  %641 = vperm.xlu0 %640, %v599
  %v642 = vpop.permute.xlu0 %641
  %645 = vset.pattern.permute.xlu0 0
  %646 = vperm.xlu0 %645, %v600
  %v647 = vpop.permute.xlu0 %646
  %650 = vset.pattern.permute.xlu0 0
  %651 = vperm.xlu0 %650, %v601
  %v652 = vpop.permute.xlu0 %651
  %655 = vset.pattern.permute.xlu0 0
  %656 = vperm.xlu0 %655, %v602
  %v657 = vpop.permute.xlu0 %656
  %660 = vset.pattern.permute.xlu0 0
  %661 = vperm.xlu0 %660, %v603
  %v662 = vpop.permute.xlu0 %661
  %665 = vset.pattern.permute.xlu0 0
  %666 = vperm.xlu0 %665, %v604
  %v667 = vpop.permute.xlu0 %666
  %670 = vset.pattern.permute.xlu0 0
  %671 = vperm.xlu0 %670, %v605
  %v672 = vpop.permute.xlu0 %671
  %675 = vset.pattern.permute.xlu0 0
  %676 = vperm.xlu0 %675, %v606
  %v677 = vpop.permute.xlu0 %676
  %680 = vset.pattern.permute.xlu0 0
  %681 = vperm.xlu0 %680, %v607
  %v682 = vpop.permute.xlu0 %681
  %685 = vset.pattern.permute.xlu0 0
  %686 = vperm.xlu0 %685, %v608
  %v687 = vpop.permute.xlu0 %686
  %v705 = vunpack.c.l.b16 %v569
  %v706 = vunpack.c.l.b16 %v570
  %v707 = vunpack.c.l.b16 %v571
  %v708 = vunpack.c.l.b16 %v572
  %v709 = vunpack.c.l.b16 %v573
  %v710 = vunpack.c.l.b16 %v574
  %v711 = vunpack.c.l.b16 %v575
  %v712 = vunpack.c.l.b16 %v576
  %v713 = vunpack.c.l.b16 %v577
  %v714 = vunpack.c.l.b16 %v578
  %v715 = vunpack.c.l.b16 %v579
  %v716 = vunpack.c.l.b16 %v580
  %v717 = vunpack.c.l.b16 %v581
  %v718 = vunpack.c.l.b16 %v582
  %v719 = vunpack.c.l.b16 %v583
  %v720 = vunpack.c.l.b16 %v584
  %v721 = vpack.c.b16 %v706, %v705
  %v722 = vpack.c.b16 %v708, %v707
  %v723 = vpack.c.b16 %v710, %v709
  %v724 = vpack.c.b16 %v712, %v711
  %v725 = vpack.c.b16 %v714, %v713
  %v726 = vpack.c.b16 %v716, %v715
  %v727 = vpack.c.b16 %v718, %v717
  %v728 = vpack.c.b16 %v720, %v719
  %737 = vmatprep.subr.bf16.mxu0 0
  %738 = vmatpush1.bf16.msra.mxu0 %v585
  %739 = vmatprep.subr.bf16.mxu0 0
  %740 = vmatpush1.bf16.msra.mxu0 %v586
  %741 = vmatprep.subr.bf16.mxu0 0
  %742 = vmatpush1.bf16.msra.mxu0 %v587
  %743 = vmatprep.subr.bf16.mxu0 0
  %744 = vmatpush1.bf16.msra.mxu0 %v588
  %745 = vmatprep.subr.bf16.mxu0 0
  %746 = vmatpush1.bf16.msra.mxu0 %v589
  %747 = vmatprep.subr.bf16.mxu0 0
  %748 = vmatpush1.bf16.msra.mxu0 %v590
  %749 = vmatprep.subr.bf16.mxu0 0
  %750 = vmatpush1.bf16.msra.mxu0 %v591
  %751 = vmatprep.subr.bf16.mxu0 0
  %752 = vmatpush1.bf16.msra.mxu0 %v592
  %753 = vmatprep.subr.bf16.mxu0 0
  %754 = vmatpush1.bf16.msra.mxu0 0
  %755 = vmatprep.subr.bf16.mxu0 0
  %756 = vmatpush1.bf16.msra.mxu0 0
  %757 = vmatprep.subr.bf16.mxu0 0
  %758 = vmatpush1.bf16.msra.mxu0 0
  %759 = vmatprep.subr.bf16.mxu0 0
  %760 = vmatpush1.bf16.msra.mxu0 0
  %761 = vmatprep.subr.bf16.mxu0 0
  %762 = vmatpush1.bf16.msra.mxu0 0
  %763 = vmatprep.subr.bf16.mxu0 0
  %764 = vmatpush1.bf16.msra.mxu0 0
  %765 = vmatprep.subr.bf16.mxu0 0
  %766 = vmatpush1.bf16.msra.mxu0 0
  %767 = vmatprep.subr.bf16.mxu0 0
  %768 = vmatpush1.bf16.msra.mxu0 0
  %769 = vmatprep.mubr.bf16.mxu0 0
  %770 = vmatmul.mubr.bf16.gmra.mrb[0].mxu0 %v721
  %v771 = vpop.f32.mrb[0].mxu0
  %v772 = vadd.f32 %v612, %v771
  %v773 = vpop.f32.mrb[0].mxu0
  %v774 = vpop.f32.mrb[0].mxu0
  %v775 = vadd.f32 %v617, %v774
  %v776 = vpop.f32.mrb[0].mxu0
  %777 = vmatprep.mubr.bf16.mxu0 0
  %778 = vmatmul.mubr.bf16.gmra.mrb[0].mxu0 %v722
  %v779 = vpop.f32.mrb[0].mxu0
  %v780 = vadd.f32 %v622, %v779
  %v781 = vpop.f32.mrb[0].mxu0
  %v782 = vpop.f32.mrb[0].mxu0
  %v783 = vadd.f32 %v627, %v782
  %v784 = vpop.f32.mrb[0].mxu0
  %785 = vmatprep.mubr.bf16.mxu0 0
  %786 = vmatmul.mubr.bf16.gmra.mrb[0].mxu0 %v723
  %v787 = vpop.f32.mrb[0].mxu0
  %v788 = vadd.f32 %v632, %v787
  %v789 = vpop.f32.mrb[0].mxu0
  %v790 = vpop.f32.mrb[0].mxu0
  %v791 = vadd.f32 %v637, %v790
  %v792 = vpop.f32.mrb[0].mxu0
  %793 = vmatprep.mubr.bf16.mxu0 0
  %794 = vmatmul.mubr.bf16.gmra.mrb[0].mxu0 %v724
  %v795 = vpop.f32.mrb[0].mxu0
  %v796 = vadd.f32 %v642, %v795
  %v797 = vpop.f32.mrb[0].mxu0
  %v798 = vpop.f32.mrb[0].mxu0
  %v799 = vadd.f32 %v647, %v798
  %v800 = vpop.f32.mrb[0].mxu0
  %801 = vmatprep.mubr.bf16.mxu0 0
  %802 = vmatmul.mubr.bf16.gmra.mrb[0].mxu0 %v725
  %v803 = vpop.f32.mrb[0].mxu0
  %v804 = vadd.f32 %v652, %v803
  %v805 = vpop.f32.mrb[0].mxu0
  %v806 = vpop.f32.mrb[0].mxu0
  %v807 = vadd.f32 %v657, %v806
  %v808 = vpop.f32.mrb[0].mxu0
  %809 = vmatprep.mubr.bf16.mxu0 0
  %810 = vmatmul.mubr.bf16.gmra.mrb[0].mxu0 %v726
  %v811 = vpop.f32.mrb[0].mxu0
  %v812 = vadd.f32 %v662, %v811
  %v813 = vpop.f32.mrb[0].mxu0
  %v814 = vpop.f32.mrb[0].mxu0
  %v815 = vadd.f32 %v667, %v814
  %v816 = vpop.f32.mrb[0].mxu0
  %817 = vmatprep.mubr.bf16.mxu0 0
  %818 = vmatmul.mubr.bf16.gmra.mrb[0].mxu0 %v727
  %v819 = vpop.f32.mrb[0].mxu0
  %v820 = vadd.f32 %v672, %v819
  %v821 = vpop.f32.mrb[0].mxu0
  %v822 = vpop.f32.mrb[0].mxu0
  %v823 = vadd.f32 %v677, %v822
  %v824 = vpop.f32.mrb[0].mxu0
  %825 = vmatprep.mubr.bf16.mxu0 0
  %826 = vmatmul.mubr.bf16.gmra.mrb[0].mxu0 %v728
  %v827 = vpop.f32.mrb[0].mxu0
  %v828 = vadd.f32 %v682, %v827
  %v829 = vpop.f32.mrb[0].mxu0
  %v830 = vpop.f32.mrb[0].mxu0
  %v831 = vadd.f32 %v687, %v830
  %v832 = vpop.f32.mrb[0].mxu0
  %833 = vdwg.mxu0
  %v834 = vmax.f32 %v772, 0.0
  %v835 = vmax.f32 %v775, 0.0
  %v836 = vmax.f32 %v780, 0.0
  %v837 = vmax.f32 %v783, 0.0
  %v838 = vmax.f32 %v788, 0.0
  %v839 = vmax.f32 %v791, 0.0
  %v840 = vmax.f32 %v796, 0.0
  %v841 = vmax.f32 %v799, 0.0
  %v842 = vmax.f32 %v804, 0.0
  %v843 = vmax.f32 %v807, 0.0
  %v844 = vmax.f32 %v812, 0.0
  %v845 = vmax.f32 %v815, 0.0
  %v846 = vmax.f32 %v820, 0.0
  %v847 = vmax.f32 %v823, 0.0
  %v848 = vmax.f32 %v828, 0.0
  %v849 = vmax.f32 %v831, 0.0
  %v850 = vld [vmem:[%s7] sm:$0xf]
  %v851 = vld [vmem:[%s7 + $0x4] sm:$0xf]
  %v852 = vld [vmem:[%s7 + $0x8] sm:$0xf]
  %v853 = vld [vmem:[%s7 + $0xc] sm:$0xf]
  %v854 = vld [vmem:[%s7 + $0x10] sm:$0xf]
  %v855 = vld [vmem:[%s7 + $0x14] sm:$0xf]
  %v856 = vld [vmem:[%s7 + $0x18] sm:$0xf]
  %v857 = vld [vmem:[%s7 + $0x1c] sm:$0xf]
  %v858 = vld [vmem:[%s7 + $0x20] sm:$0xf]
  %v859 = vld [vmem:[%s7 + $0x24] sm:$0xf]
  %v860 = vld [vmem:[%s7 + $0x28] sm:$0xf]
  %v861 = vld [vmem:[%s7 + $0x2c] sm:$0xf]
  %v862 = vld [vmem:[%s7 + $0x30] sm:$0xf]
  %v863 = vld [vmem:[%s7 + $0x34] sm:$0xf]
  %v864 = vld [vmem:[%s7 + $0x38] sm:$0xf]
  %v865 = vld [vmem:[%s7 + $0x3c] sm:$0xf]
  %v866 = vpack.c.bf16 %v835, %v834
  %v867 = vpack.c.bf16 %v837, %v836
  %v868 = vpack.c.bf16 %v839, %v838
  %v869 = vpack.c.bf16 %v841, %v840
  %v870 = vpack.c.bf16 %v843, %v842
  %v871 = vpack.c.bf16 %v845, %v844
  %v872 = vpack.c.bf16 %v847, %v846
  %v873 = vpack.c.bf16 %v849, %v848
  %v874 = vld [vmem:[%s8] sm:$0xff]
  %v875 = vld [vmem:[%s8 + $0x8] sm:$0xff]
  %v876 = vld [vmem:[%s8 + $0x10] sm:$0xff]
  %v877 = vld [vmem:[%s8 + $0x18] sm:$0xff]
  %v878 = vld [vmem:[%s8 + $0x20] sm:$0xff]
  %v879 = vld [vmem:[%s8 + $0x28] sm:$0xff]
  %v880 = vld [vmem:[%s8 + $0x30] sm:$0xff]
  %v881 = vld [vmem:[%s8 + $0x38] sm:$0xff]
  %v882 = vld [vmem:[%s8 + $0x40] sm:$0xff]
  %v883 = vld [vmem:[%s8 + $0x48] sm:$0xff]
  %v884 = vld [vmem:[%s8 + $0x50] sm:$0xff]
  %v885 = vld [vmem:[%s8 + $0x58] sm:$0xff]
  %v886 = vld [vmem:[%s8 + $0x60] sm:$0xff]
  %v887 = vld [vmem:[%s8 + $0x68] sm:$0xff]
  %v888 = vld [vmem:[%s8 + $0x70] sm:$0xff]
  %v889 = vld [vmem:[%s8 + $0x78] sm:$0xff]
  %891 = vset.pattern.permute.xlu0 0
  %892 = vperm.xlu0 %891, %v874
  %v893 = vpop.permute.xlu0 %892
  %896 = vset.pattern.permute.xlu0 0
  %897 = vperm.xlu0 %896, %v875
  %v898 = vpop.permute.xlu0 %897
  %901 = vset.pattern.permute.xlu0 0
  %902 = vperm.xlu0 %901, %v876
  %v903 = vpop.permute.xlu0 %902
  %906 = vset.pattern.permute.xlu0 0
  %907 = vperm.xlu0 %906, %v877
  %v908 = vpop.permute.xlu0 %907
  %911 = vset.pattern.permute.xlu0 0
  %912 = vperm.xlu0 %911, %v878
  %v913 = vpop.permute.xlu0 %912
  %916 = vset.pattern.permute.xlu0 0
  %917 = vperm.xlu0 %916, %v879
  %v918 = vpop.permute.xlu0 %917
  %921 = vset.pattern.permute.xlu0 0
  %922 = vperm.xlu0 %921, %v880
  %v923 = vpop.permute.xlu0 %922
  %926 = vset.pattern.permute.xlu0 0
  %927 = vperm.xlu0 %926, %v881
  %v928 = vpop.permute.xlu0 %927
  %931 = vset.pattern.permute.xlu0 0
  %932 = vperm.xlu0 %931, %v882
  %v933 = vpop.permute.xlu0 %932
  %936 = vset.pattern.permute.xlu0 0
  %937 = vperm.xlu0 %936, %v883
  %v938 = vpop.permute.xlu0 %937
  %941 = vset.pattern.permute.xlu0 0
  %942 = vperm.xlu0 %941, %v884
  %v943 = vpop.permute.xlu0 %942
  %946 = vset.pattern.permute.xlu0 0
  %947 = vperm.xlu0 %946, %v885
  %v948 = vpop.permute.xlu0 %947
  %951 = vset.pattern.permute.xlu0 0
  %952 = vperm.xlu0 %951, %v886
  %v953 = vpop.permute.xlu0 %952
  %956 = vset.pattern.permute.xlu0 0
  %957 = vperm.xlu0 %956, %v887
  %v958 = vpop.permute.xlu0 %957
  %961 = vset.pattern.permute.xlu0 0
  %962 = vperm.xlu0 %961, %v888
  %v963 = vpop.permute.xlu0 %962
  %966 = vset.pattern.permute.xlu0 0
  %967 = vperm.xlu0 %966, %v889
  %v968 = vpop.permute.xlu0 %967
  %v986 = vunpack.c.l.b16 %v850
  %v987 = vunpack.c.l.b16 %v851
  %v988 = vunpack.c.l.b16 %v852
  %v989 = vunpack.c.l.b16 %v853
  %v990 = vunpack.c.l.b16 %v854
  %v991 = vunpack.c.l.b16 %v855
  %v992 = vunpack.c.l.b16 %v856
  %v993 = vunpack.c.l.b16 %v857
  %v994 = vunpack.c.l.b16 %v858
  %v995 = vunpack.c.l.b16 %v859
  %v996 = vunpack.c.l.b16 %v860
  %v997 = vunpack.c.l.b16 %v861
  %v998 = vunpack.c.l.b16 %v862
  %v999 = vunpack.c.l.b16 %v863
  %v1000 = vunpack.c.l.b16 %v864
  %v1001 = vunpack.c.l.b16 %v865
  %v1002 = vpack.c.b16 %v987, %v986
  %v1003 = vpack.c.b16 %v989, %v988
  %v1004 = vpack.c.b16 %v991, %v990
  %v1005 = vpack.c.b16 %v993, %v992
  %v1006 = vpack.c.b16 %v995, %v994
  %v1007 = vpack.c.b16 %v997, %v996
  %v1008 = vpack.c.b16 %v999, %v998
  %v1009 = vpack.c.b16 %v1001, %v1000
  %1018 = vmatprep.subr.bf16.mxu0 0
  %1019 = vmatpush1.bf16.msra.mxu0 %v866
  %1020 = vmatprep.subr.bf16.mxu0 0
  %1021 = vmatpush1.bf16.msra.mxu0 %v867
  %1022 = vmatprep.subr.bf16.mxu0 0
  %1023 = vmatpush1.bf16.msra.mxu0 %v868
  %1024 = vmatprep.subr.bf16.mxu0 0
  %1025 = vmatpush1.bf16.msra.mxu0 %v869
  %1026 = vmatprep.subr.bf16.mxu0 0
  %1027 = vmatpush1.bf16.msra.mxu0 %v870
  %1028 = vmatprep.subr.bf16.mxu0 0
  %1029 = vmatpush1.bf16.msra.mxu0 %v871
  %1030 = vmatprep.subr.bf16.mxu0 0
  %1031 = vmatpush1.bf16.msra.mxu0 %v872
  %1032 = vmatprep.subr.bf16.mxu0 0
  %1033 = vmatpush1.bf16.msra.mxu0 %v873
  %1034 = vmatprep.subr.bf16.mxu0 0
  %1035 = vmatpush1.bf16.msra.mxu0 0
  %1036 = vmatprep.subr.bf16.mxu0 0
  %1037 = vmatpush1.bf16.msra.mxu0 0
  %1038 = vmatprep.subr.bf16.mxu0 0
  %1039 = vmatpush1.bf16.msra.mxu0 0
  %1040 = vmatprep.subr.bf16.mxu0 0
  %1041 = vmatpush1.bf16.msra.mxu0 0
  %1042 = vmatprep.subr.bf16.mxu0 0
  %1043 = vmatpush1.bf16.msra.mxu0 0
  %1044 = vmatprep.subr.bf16.mxu0 0
  %1045 = vmatpush1.bf16.msra.mxu0 0
  %1046 = vmatprep.subr.bf16.mxu0 0
  %1047 = vmatpush1.bf16.msra.mxu0 0
  %1048 = vmatprep.subr.bf16.mxu0 0
  %1049 = vmatpush1.bf16.msra.mxu0 0
  %1050 = vmatprep.mubr.bf16.mxu0 0
  %1051 = vmatmul.mubr.bf16.gmra.mrb[0].mxu0 %v1002
  %v1052 = vpop.f32.mrb[0].mxu0
  %v1053 = vadd.f32 %v893, %v1052
  %v1054 = vpop.f32.mrb[0].mxu0
  %v1055 = vpop.f32.mrb[0].mxu0
  %v1056 = vadd.f32 %v898, %v1055
  %v1057 = vpop.f32.mrb[0].mxu0
  %1058 = vmatprep.mubr.bf16.mxu0 0
  %1059 = vmatmul.mubr.bf16.gmra.mrb[0].mxu0 %v1003
  %v1060 = vpop.f32.mrb[0].mxu0
  %v1061 = vadd.f32 %v903, %v1060
  %v1062 = vpop.f32.mrb[0].mxu0
  %v1063 = vpop.f32.mrb[0].mxu0
  %v1064 = vadd.f32 %v908, %v1063
  %v1065 = vpop.f32.mrb[0].mxu0
  %1066 = vmatprep.mubr.bf16.mxu0 0
  %1067 = vmatmul.mubr.bf16.gmra.mrb[0].mxu0 %v1004
  %v1068 = vpop.f32.mrb[0].mxu0
  %v1069 = vadd.f32 %v913, %v1068
  %v1070 = vpop.f32.mrb[0].mxu0
  %v1071 = vpop.f32.mrb[0].mxu0
  %v1072 = vadd.f32 %v918, %v1071
  %v1073 = vpop.f32.mrb[0].mxu0
  %1074 = vmatprep.mubr.bf16.mxu0 0
  %1075 = vmatmul.mubr.bf16.gmra.mrb[0].mxu0 %v1005
  %v1076 = vpop.f32.mrb[0].mxu0
  %v1077 = vadd.f32 %v923, %v1076
  %v1078 = vpop.f32.mrb[0].mxu0
  %v1079 = vpop.f32.mrb[0].mxu0
  %v1080 = vadd.f32 %v928, %v1079
  %v1081 = vpop.f32.mrb[0].mxu0
  %1082 = vmatprep.mubr.bf16.mxu0 0
  %1083 = vmatmul.mubr.bf16.gmra.mrb[0].mxu0 %v1006
  %v1084 = vpop.f32.mrb[0].mxu0
  %v1085 = vadd.f32 %v933, %v1084
  %v1086 = vpop.f32.mrb[0].mxu0
  %v1087 = vpop.f32.mrb[0].mxu0
  %v1088 = vadd.f32 %v938, %v1087
  %v1089 = vpop.f32.mrb[0].mxu0
  %1090 = vmatprep.mubr.bf16.mxu0 0
  %1091 = vmatmul.mubr.bf16.gmra.mrb[0].mxu0 %v1007
  %v1092 = vpop.f32.mrb[0].mxu0
  %v1093 = vadd.f32 %v943, %v1092
  %v1094 = vpop.f32.mrb[0].mxu0
  %v1095 = vpop.f32.mrb[0].mxu0
  %v1096 = vadd.f32 %v948, %v1095
  %v1097 = vpop.f32.mrb[0].mxu0
  %1098 = vmatprep.mubr.bf16.mxu0 0
  %1099 = vmatmul.mubr.bf16.gmra.mrb[0].mxu0 %v1008
  %v1100 = vpop.f32.mrb[0].mxu0
  %v1101 = vadd.f32 %v953, %v1100
  %v1102 = vpop.f32.mrb[0].mxu0
  %v1103 = vpop.f32.mrb[0].mxu0
  %v1104 = vadd.f32 %v958, %v1103
  %v1105 = vpop.f32.mrb[0].mxu0
  %1106 = vmatprep.mubr.bf16.mxu0 0
  %1107 = vmatmul.mubr.bf16.gmra.mrb[0].mxu0 %v1009
  %v1108 = vpop.f32.mrb[0].mxu0
  %v1109 = vadd.f32 %v963, %v1108
  %v1110 = vpop.f32.mrb[0].mxu0
  %v1111 = vpop.f32.mrb[0].mxu0
  %v1112 = vadd.f32 %v968, %v1111
  %v1113 = vpop.f32.mrb[0].mxu0
  %1114 = vdwg.mxu0
  %v1115 = vmax.f32 %v1053, 0.0
  %v1116 = vmax.f32 %v1056, 0.0
  %v1117 = vmax.f32 %v1061, 0.0
  %v1118 = vmax.f32 %v1064, 0.0
  %v1119 = vmax.f32 %v1069, 0.0
  %v1120 = vmax.f32 %v1072, 0.0
  %v1121 = vmax.f32 %v1077, 0.0
  %v1122 = vmax.f32 %v1080, 0.0
  %v1123 = vmax.f32 %v1085, 0.0
  %v1124 = vmax.f32 %v1088, 0.0
  %v1125 = vmax.f32 %v1093, 0.0
  %v1126 = vmax.f32 %v1096, 0.0
  %v1127 = vmax.f32 %v1101, 0.0
  %v1128 = vmax.f32 %v1104, 0.0
  %v1129 = vmax.f32 %v1109, 0.0
  %v1130 = vmax.f32 %v1112, 0.0
  %v1131 = vld [vmem:[%s9] sm:$0x1]
  %v1132 = vpack.c.bf16 %v1116, %v1115
  %v1133 = vpack.c.bf16 %v1118, %v1117
  %v1134 = vpack.c.bf16 %v1120, %v1119
  %v1135 = vpack.c.bf16 %v1122, %v1121
  %v1136 = vpack.c.bf16 %v1124, %v1123
  %v1137 = vpack.c.bf16 %v1126, %v1125
  %v1138 = vpack.c.bf16 %v1128, %v1127
  %v1139 = vpack.c.bf16 %v1130, %v1129
  %v1140 = vld [vmem:[#allocation2] sm:$0x1]
  %1142 = vset.pattern.permute.xlu0 0
  %1143 = vperm.xlu0 %1142, %v1140
  %v1144 = vpop.permute.xlu0 %1143
  %v1146 = vlaneseq
  %v1147 = vshrl.u32 %v1146, 7
  %v1148 = vsub.s32 0, %v1147
  %v1149 = vrot.slane %v1144, %v1148
  %1150 = vmatprep.subr.bf16.mxu0 0
  %1151 = vmatpush1.bf16.msra.mxu0 %v1132
  %1152 = vmatprep.subr.bf16.mxu0 0
  %1153 = vmatpush1.bf16.msra.mxu0 %v1133
  %1154 = vmatprep.subr.bf16.mxu0 0
  %1155 = vmatpush1.bf16.msra.mxu0 %v1134
  %1156 = vmatprep.subr.bf16.mxu0 0
  %1157 = vmatpush1.bf16.msra.mxu0 %v1135
  %1158 = vmatprep.subr.bf16.mxu0 0
  %1159 = vmatpush1.bf16.msra.mxu0 %v1136
  %1160 = vmatprep.subr.bf16.mxu0 0
  %1161 = vmatpush1.bf16.msra.mxu0 %v1137
  %1162 = vmatprep.subr.bf16.mxu0 0
  %1163 = vmatpush1.bf16.msra.mxu0 %v1138
  %1164 = vmatprep.subr.bf16.mxu0 0
  %1165 = vmatpush1.bf16.msra.mxu0 %v1139
  %1166 = vmatprep.subr.bf16.mxu0 0
  %1167 = vmatpush1.bf16.msra.mxu0 0
  %1168 = vmatprep.subr.bf16.mxu0 0
  %1169 = vmatpush1.bf16.msra.mxu0 0
  %1170 = vmatprep.subr.bf16.mxu0 0
  %1171 = vmatpush1.bf16.msra.mxu0 0
  %1172 = vmatprep.subr.bf16.mxu0 0
  %1173 = vmatpush1.bf16.msra.mxu0 0
  %1174 = vmatprep.subr.bf16.mxu0 0
  %1175 = vmatpush1.bf16.msra.mxu0 0
  %1176 = vmatprep.subr.bf16.mxu0 0
  %1177 = vmatpush1.bf16.msra.mxu0 0
  %1178 = vmatprep.subr.bf16.mxu0 0
  %1179 = vmatpush1.bf16.msra.mxu0 0
  %1180 = vmatprep.subr.bf16.mxu0 0
  %1181 = vmatpush1.bf16.msra.mxu0 0
  %1182 = vmatprep.mubr.bf16.mxu0 0
  %1183 = vmatmul.mubr.bf16.gmra.mrb[0].mxu0 %v1131
  %v1184 = vpop.f32.mrb[0].mxu0
  %v1185 = vadd.f32 %v1149, %v1184
  %v1186 = vpop.f32.mrb[0].mxu0
  %v1187 = vpop.f32.mrb[0].mxu0
  %v1188 = vpop.f32.mrb[0].mxu0
  %1189 = vdwg.mxu0
  %1190 = vst [vmem:[%s11] sm:$0x1] %v1185
  // Predicated region
  $region46: #{fcnn_forward.1} parent=0 // pred_check
    _
  $region47: #{fcnn_forward.1} parent=0 // pred_check_branch
    %1192 = sbr.rel (0) target = $region49
  $region48: #{fcnn_forward.1} parent=0 // pred_region
    _
  $region49: #{fcnn_forward.1} parent=0 // pred_fallthru
    _
  // Predicated region
  $region50: #{fcnn_forward.1} parent=0 // pred_check
    _
  $region51: #{fcnn_forward.1} parent=0 // pred_check_branch
    %1194 = sbr.rel (0) target = $region53
  $region52: #{fcnn_forward.1} parent=0 // pred_region
    _
  $region53: #{fcnn_forward.1} parent=0 // pred_fallthru
    _

</llo_original>
